<compile_context>
chip_gen: v7x
topology: tpu7x:2x2x1
jax: 0.10.0
libtpu: 0.0.40
codegen_flags: <defaults>
</compile_context>

<pallas_src>
import jax
import jax.numpy as jnp
from jax import lax
from jax.experimental import pallas as pl
from jax.experimental.pallas import tpu as pltpu

N_LEVELS = 7
N_COLOR = 3
N_ECC = 4          # n_eccentricity (split into int [:2] / ext [2:] halves)
N_AZ = 16
N_THETA = 8
N_PHASE = 1

TP = N_THETA * N_PHASE            # 8   -> lane dim of each source tile
EA = (N_ECC // 2) * N_AZ          # 32  -> sublane dim of each source tile (e2, a)
ROWS = N_LEVELS * N_COLOR * 2     # 42  -> (l, c, s) source rows per batch element
C_OUT = 2 * N_COLOR * TP          # 48  -> output channels (cat of int/ext halves)
W_OUT = N_LEVELS * (N_ECC // 2) * N_AZ   # 224 -> flattened (l, e2, a) output width


def encoder_kernel(x_ref, o_ref):
    """Layout-shuffle kernel.

    x_ref: (bt, 42, 32, 8)  = (batch, l*6 + c*2 + s, e2*16 + a, t)
    o_ref: (bt, 48, 224)    = (batch, s*24 + c*8 + t, l*32 + e2*16 + a)
    """

    def per_batch(bi, carry):
        # Small static (s, c) loops stay unrolled (6 iterations); each ends in
        # a store, so vreg pressure stays bounded.
        for s in range(2):                       # int / ext half (cat dim)
            for c in range(N_COLOR):
                # Gather the 7 per-level (32, 8) tiles of this (color, half)
                # group and stack them along sublanes (8-aligned, no shifts):
                # rows of `grp` are l*32 + e2*16 + a, columns are t.
                grp = jnp.concatenate(
                    [x_ref[bi, l * (N_COLOR * 2) + c * 2 + s, :, :]
                     for l in range(N_LEVELS)],
                    axis=0)                      # (224, 8)
                # One transpose + one wide lane-dense store per group instead
                # of 7 tiny transposes and 7 masked 32-lane stores.
                ch0 = s * (N_COLOR * TP) + c * TP
                o_ref[bi, ch0:ch0 + TP, :] = grp.T        # (8, 224)
        return carry

    lax.fori_loop(0, x_ref.shape[0], per_batch, 0)


def encoder_forward(x, theta=None):
    """Pallas implementation of Encoder.forward (theta=None path)."""
    if theta is not None:
        # TODO(synk): the `theta is not None` branch (F.affine_grid +
        # F.grid_sample) has no clean Pallas equivalent and is not implemented.
        raise NotImplementedError("theta (affine_grid/grid_sample) path not implemented")

    B, L, C, E, A, T, P = x.shape
    assert (L, C, E, A, T, P) == (N_LEVELS, N_COLOR, N_ECC, N_AZ, N_THETA, N_PHASE)

    # Pure (free) reshape: (b, l, c, (s,e2), a, t, p) -> (b, (l,c,s), (e2,a), (t,p)).
    x4 = x.reshape(B, ROWS, EA, TP)

    # Batch tile: the (bt, 42, 32, 8) block is lane-padded in VMEM (last dim 8
    # padded to 128 lanes) -> ~672 KiB / element, ~1.35 MiB double buffered.
    # Cap bt so (a) blocks stay well under VMEM even on v7x (64 MiB) and
    # (b) the grid keeps >= 2 parallel steps whenever B >= 2 so the batch axis
    # can shard across v7x's two TensorCores.
    cap = max(1, B // 2)
    bt = next(d for d in (16, 8, 4, 2, 1) if d <= cap and B % d == 0)
    grid = (B // bt,)

    out3 = pl.pallas_call(
        encoder_kernel,
        out_shape=jax.ShapeDtypeStruct((B, C_OUT, W_OUT), x.dtype),
        grid=grid,
        in_specs=[pl.BlockSpec((bt, ROWS, EA, TP), lambda b: (b, 0, 0, 0))],
        out_specs=pl.BlockSpec((bt, C_OUT, W_OUT), lambda b: (b, 0, 0)),
        compiler_params=pltpu.CompilerParams(
            dimension_semantics=("parallel",),
            vmem_limit_bytes=48 * 1024 * 1024,
        ),
    )(x4)

    # Free reshape back to the module's NCHW output layout.
    return out3.reshape(B, C_OUT, L * (E // 2), A)


def encoder_ref(x):
    """Pure-JAX reference mirroring the PyTorch forward (theta=None)."""
    B, L, C, E, A, T, P = x.shape
    outs = []
    for xp in (x[:, :, :, :2], x[:, :, :, 2:]):
        xp = jnp.transpose(xp, (0, 2, 5, 6, 1, 3, 4))        # (B, C, T, P, L, E//2, A)
        xp = xp.reshape(B, C * T * P, L * (E // 2), A)
        outs.append(xp)
    return jnp.concatenate(outs, axis=1)


if __name__ == "__main__":
    key = jax.random.PRNGKey(0)
    # B=2 -> bt=1, grid=(2,) (keeps both v7x TensorCores busy);
    # B=4 -> bt=2, grid=(2,) (exercises the multi-element block path).
    for B in (2, 4):
        x = jax.random.normal(
            key, (B, N_LEVELS, N_COLOR, N_ECC, N_AZ, N_THETA, N_PHASE),
            dtype=jnp.float32)
        out = jax.block_until_ready(encoder_forward(x))
        ref = encoder_ref(x)
        assert out.shape == (B, 2 * N_COLOR * N_THETA * N_PHASE,
                             N_LEVELS * N_ECC // 2, N_AZ), out.shape
        assert out.dtype == jnp.float32
        assert jnp.allclose(out, ref), f"Pallas output does not match reference (B={B})"
    print("KERNEL_OK")
</pallas_src>

<mosaic_0001>
module attributes {stable_mosaic.version = 11 : i64} {
  func.func @encoder_kernel(%arg0: i32, %arg1: memref<1x42x32x8xf32, #tpu.memory_space<vmem>>, %arg2: memref<1x48x224xf32, #tpu.memory_space<vmem>>) attributes {dimension_semantics = [#tpu.dimension_semantics<parallel>], iteration_bounds = array<i64: 2>, scalar_prefetch = 0 : i64, scratch_operands = 0 : i64, tpu.core_type = #tpu.core_type<tc>, window_params = [{transform_indices = @transform_0, window_bounds = array<i64: 1, 42, 32, 8>}, {transform_indices = @transform_1, window_bounds = array<i64: 1, 48, 224>}]} {
    %c0_i32 = arith.constant 0 : i32
    %0 = arith.index_cast %c0_i32 : i32 to index
    %c0 = arith.constant 0 : index
    %c0_0 = arith.constant 0 : index
    %c0_1 = arith.constant 0 : index
    %1 = vector.load %arg1[%0, %c0, %c0_0, %c0_1] : memref<1x42x32x8xf32, #tpu.memory_space<vmem>>, vector<1x1x32x8xf32>
    %2 = vector.shape_cast %1 : vector<1x1x32x8xf32> to vector<32x8xf32>
    %3 = arith.index_cast %c0_i32 : i32 to index
    %c6 = arith.constant 6 : index
    %c0_2 = arith.constant 0 : index
    %c0_3 = arith.constant 0 : index
    %4 = vector.load %arg1[%3, %c6, %c0_2, %c0_3] : memref<1x42x32x8xf32, #tpu.memory_space<vmem>>, vector<1x1x32x8xf32>
    %5 = vector.shape_cast %4 : vector<1x1x32x8xf32> to vector<32x8xf32>
    %6 = arith.index_cast %c0_i32 : i32 to index
    %c12 = arith.constant 12 : index
    %c0_4 = arith.constant 0 : index
    %c0_5 = arith.constant 0 : index
    %7 = vector.load %arg1[%6, %c12, %c0_4, %c0_5] : memref<1x42x32x8xf32, #tpu.memory_space<vmem>>, vector<1x1x32x8xf32>
    %8 = vector.shape_cast %7 : vector<1x1x32x8xf32> to vector<32x8xf32>
    %9 = arith.index_cast %c0_i32 : i32 to index
    %c18 = arith.constant 18 : index
    %c0_6 = arith.constant 0 : index
    %c0_7 = arith.constant 0 : index
    %10 = vector.load %arg1[%9, %c18, %c0_6, %c0_7] : memref<1x42x32x8xf32, #tpu.memory_space<vmem>>, vector<1x1x32x8xf32>
    %11 = vector.shape_cast %10 : vector<1x1x32x8xf32> to vector<32x8xf32>
    %12 = arith.index_cast %c0_i32 : i32 to index
    %c24 = arith.constant 24 : index
    %c0_8 = arith.constant 0 : index
    %c0_9 = arith.constant 0 : index
    %13 = vector.load %arg1[%12, %c24, %c0_8, %c0_9] : memref<1x42x32x8xf32, #tpu.memory_space<vmem>>, vector<1x1x32x8xf32>
    %14 = vector.shape_cast %13 : vector<1x1x32x8xf32> to vector<32x8xf32>
    %15 = arith.index_cast %c0_i32 : i32 to index
    %c30 = arith.constant 30 : index
    %c0_10 = arith.constant 0 : index
    %c0_11 = arith.constant 0 : index
    %16 = vector.load %arg1[%15, %c30, %c0_10, %c0_11] : memref<1x42x32x8xf32, #tpu.memory_space<vmem>>, vector<1x1x32x8xf32>
    %17 = vector.shape_cast %16 : vector<1x1x32x8xf32> to vector<32x8xf32>
    %18 = arith.index_cast %c0_i32 : i32 to index
    %c36 = arith.constant 36 : index
    %c0_12 = arith.constant 0 : index
    %c0_13 = arith.constant 0 : index
    %19 = vector.load %arg1[%18, %c36, %c0_12, %c0_13] : memref<1x42x32x8xf32, #tpu.memory_space<vmem>>, vector<1x1x32x8xf32>
    %20 = vector.shape_cast %19 : vector<1x1x32x8xf32> to vector<32x8xf32>
    %21 = tpu.concatenate %2, %5, %8, %11, %14, %17, %20 in 0 : vector<32x8xf32>, vector<32x8xf32>, vector<32x8xf32>, vector<32x8xf32>, vector<32x8xf32>, vector<32x8xf32>, vector<32x8xf32> -> vector<224x8xf32>
    %22 = tpu.transpose %21, [1, 0] : vector<224x8xf32> -> vector<8x224xf32>
    %23 = arith.index_cast %c0_i32 : i32 to index
    %c0_14 = arith.constant 0 : index
    %c0_15 = arith.constant 0 : index
    %24 = vector.load %arg2[%23, %c0_14, %c0_15] : memref<1x48x224xf32, #tpu.memory_space<vmem>>, vector<1x8x224xf32>
    %25 = vector.shape_cast %24 : vector<1x8x224xf32> to vector<8x224xf32>
    %26 = vector.shape_cast %22 : vector<8x224xf32> to vector<1x8x224xf32>
    tpu.vector_store %arg2[%23, %c0_14, %c0_15], %26 {strides = array<i32>} : memref<1x48x224xf32, #tpu.memory_space<vmem>>, vector<1x8x224xf32>,
    %27 = arith.index_cast %c0_i32 : i32 to index
    %c2 = arith.constant 2 : index
    %c0_16 = arith.constant 0 : index
    %c0_17 = arith.constant 0 : index
    %28 = vector.load %arg1[%27, %c2, %c0_16, %c0_17] : memref<1x42x32x8xf32, #tpu.memory_space<vmem>>, vector<1x1x32x8xf32>
    %29 = vector.shape_cast %28 : vector<1x1x32x8xf32> to vector<32x8xf32>
    %30 = arith.index_cast %c0_i32 : i32 to index
    %c8 = arith.constant 8 : index
    %c0_18 = arith.constant 0 : index
    %c0_19 = arith.constant 0 : index
    %31 = vector.load %arg1[%30, %c8, %c0_18, %c0_19] : memref<1x42x32x8xf32, #tpu.memory_space<vmem>>, vector<1x1x32x8xf32>
    %32 = vector.shape_cast %31 : vector<1x1x32x8xf32> to vector<32x8xf32>
    %33 = arith.index_cast %c0_i32 : i32 to index
    %c14 = arith.constant 14 : index
    %c0_20 = arith.constant 0 : index
    %c0_21 = arith.constant 0 : index
    %34 = vector.load %arg1[%33, %c14, %c0_20, %c0_21] : memref<1x42x32x8xf32, #tpu.memory_space<vmem>>, vector<1x1x32x8xf32>
    %35 = vector.shape_cast %34 : vector<1x1x32x8xf32> to vector<32x8xf32>
    %36 = arith.index_cast %c0_i32 : i32 to index
    %c20 = arith.constant 20 : index
    %c0_22 = arith.constant 0 : index
    %c0_23 = arith.constant 0 : index
    %37 = vector.load %arg1[%36, %c20, %c0_22, %c0_23] : memref<1x42x32x8xf32, #tpu.memory_space<vmem>>, vector<1x1x32x8xf32>
    %38 = vector.shape_cast %37 : vector<1x1x32x8xf32> to vector<32x8xf32>
    %39 = arith.index_cast %c0_i32 : i32 to index
    %c26 = arith.constant 26 : index
    %c0_24 = arith.constant 0 : index
    %c0_25 = arith.constant 0 : index
    %40 = vector.load %arg1[%39, %c26, %c0_24, %c0_25] : memref<1x42x32x8xf32, #tpu.memory_space<vmem>>, vector<1x1x32x8xf32>
    %41 = vector.shape_cast %40 : vector<1x1x32x8xf32> to vector<32x8xf32>
    %42 = arith.index_cast %c0_i32 : i32 to index
    %c32 = arith.constant 32 : index
    %c0_26 = arith.constant 0 : index
    %c0_27 = arith.constant 0 : index
    %43 = vector.load %arg1[%42, %c32, %c0_26, %c0_27] : memref<1x42x32x8xf32, #tpu.memory_space<vmem>>, vector<1x1x32x8xf32>
    %44 = vector.shape_cast %43 : vector<1x1x32x8xf32> to vector<32x8xf32>
    %45 = arith.index_cast %c0_i32 : i32 to index
    %c38 = arith.constant 38 : index
    %c0_28 = arith.constant 0 : index
    %c0_29 = arith.constant 0 : index
    %46 = vector.load %arg1[%45, %c38, %c0_28, %c0_29] : memref<1x42x32x8xf32, #tpu.memory_space<vmem>>, vector<1x1x32x8xf32>
    %47 = vector.shape_cast %46 : vector<1x1x32x8xf32> to vector<32x8xf32>
    %48 = tpu.concatenate %29, %32, %35, %38, %41, %44, %47 in 0 : vector<32x8xf32>, vector<32x8xf32>, vector<32x8xf32>, vector<32x8xf32>, vector<32x8xf32>, vector<32x8xf32>, vector<32x8xf32> -> vector<224x8xf32>
    %49 = tpu.transpose %48, [1, 0] : vector<224x8xf32> -> vector<8x224xf32>
    %50 = arith.index_cast %c0_i32 : i32 to index
    %c8_30 = arith.constant 8 : index
    %c0_31 = arith.constant 0 : index
    %51 = vector.load %arg2[%50, %c8_30, %c0_31] : memref<1x48x224xf32, #tpu.memory_space<vmem>>, vector<1x8x224xf32>
    %52 = vector.shape_cast %51 : vector<1x8x224xf32> to vector<8x224xf32>
    %53 = vector.shape_cast %49 : vector<8x224xf32> to vector<1x8x224xf32>
    tpu.vector_store %arg2[%50, %c8_30, %c0_31], %53 {strides = array<i32>} : memref<1x48x224xf32, #tpu.memory_space<vmem>>, vector<1x8x224xf32>,
    %54 = arith.index_cast %c0_i32 : i32 to index
    %c4 = arith.constant 4 : index
    %c0_32 = arith.constant 0 : index
    %c0_33 = arith.constant 0 : index
    %55 = vector.load %arg1[%54, %c4, %c0_32, %c0_33] : memref<1x42x32x8xf32, #tpu.memory_space<vmem>>, vector<1x1x32x8xf32>
    %56 = vector.shape_cast %55 : vector<1x1x32x8xf32> to vector<32x8xf32>
    %57 = arith.index_cast %c0_i32 : i32 to index
    %c10 = arith.constant 10 : index
    %c0_34 = arith.constant 0 : index
    %c0_35 = arith.constant 0 : index
    %58 = vector.load %arg1[%57, %c10, %c0_34, %c0_35] : memref<1x42x32x8xf32, #tpu.memory_space<vmem>>, vector<1x1x32x8xf32>
    %59 = vector.shape_cast %58 : vector<1x1x32x8xf32> to vector<32x8xf32>
    %60 = arith.index_cast %c0_i32 : i32 to index
    %c16 = arith.constant 16 : index
    %c0_36 = arith.constant 0 : index
    %c0_37 = arith.constant 0 : index
    %61 = vector.load %arg1[%60, %c16, %c0_36, %c0_37] : memref<1x42x32x8xf32, #tpu.memory_space<vmem>>, vector<1x1x32x8xf32>
    %62 = vector.shape_cast %61 : vector<1x1x32x8xf32> to vector<32x8xf32>
    %63 = arith.index_cast %c0_i32 : i32 to index
    %c22 = arith.constant 22 : index
    %c0_38 = arith.constant 0 : index
    %c0_39 = arith.constant 0 : index
    %64 = vector.load %arg1[%63, %c22, %c0_38, %c0_39] : memref<1x42x32x8xf32, #tpu.memory_space<vmem>>, vector<1x1x32x8xf32>
    %65 = vector.shape_cast %64 : vector<1x1x32x8xf32> to vector<32x8xf32>
    %66 = arith.index_cast %c0_i32 : i32 to index
    %c28 = arith.constant 28 : index
    %c0_40 = arith.constant 0 : index
    %c0_41 = arith.constant 0 : index
    %67 = vector.load %arg1[%66, %c28, %c0_40, %c0_41] : memref<1x42x32x8xf32, #tpu.memory_space<vmem>>, vector<1x1x32x8xf32>
    %68 = vector.shape_cast %67 : vector<1x1x32x8xf32> to vector<32x8xf32>
    %69 = arith.index_cast %c0_i32 : i32 to index
    %c34 = arith.constant 34 : index
    %c0_42 = arith.constant 0 : index
    %c0_43 = arith.constant 0 : index
    %70 = vector.load %arg1[%69, %c34, %c0_42, %c0_43] : memref<1x42x32x8xf32, #tpu.memory_space<vmem>>, vector<1x1x32x8xf32>
    %71 = vector.shape_cast %70 : vector<1x1x32x8xf32> to vector<32x8xf32>
    %72 = arith.index_cast %c0_i32 : i32 to index
    %c40 = arith.constant 40 : index
    %c0_44 = arith.constant 0 : index
    %c0_45 = arith.constant 0 : index
    %73 = vector.load %arg1[%72, %c40, %c0_44, %c0_45] : memref<1x42x32x8xf32, #tpu.memory_space<vmem>>, vector<1x1x32x8xf32>
    %74 = vector.shape_cast %73 : vector<1x1x32x8xf32> to vector<32x8xf32>
    %75 = tpu.concatenate %56, %59, %62, %65, %68, %71, %74 in 0 : vector<32x8xf32>, vector<32x8xf32>, vector<32x8xf32>, vector<32x8xf32>, vector<32x8xf32>, vector<32x8xf32>, vector<32x8xf32> -> vector<224x8xf32>
    %76 = tpu.transpose %75, [1, 0] : vector<224x8xf32> -> vector<8x224xf32>
    %77 = arith.index_cast %c0_i32 : i32 to index
    %c16_46 = arith.constant 16 : index
    %c0_47 = arith.constant 0 : index
    %78 = vector.load %arg2[%77, %c16_46, %c0_47] : memref<1x48x224xf32, #tpu.memory_space<vmem>>, vector<1x8x224xf32>
    %79 = vector.shape_cast %78 : vector<1x8x224xf32> to vector<8x224xf32>
    %80 = vector.shape_cast %76 : vector<8x224xf32> to vector<1x8x224xf32>
    tpu.vector_store %arg2[%77, %c16_46, %c0_47], %80 {strides = array<i32>} : memref<1x48x224xf32, #tpu.memory_space<vmem>>, vector<1x8x224xf32>,
    %81 = arith.index_cast %c0_i32 : i32 to index
    %c1 = arith.constant 1 : index
    %c0_48 = arith.constant 0 : index
    %c0_49 = arith.constant 0 : index
    %82 = vector.load %arg1[%81, %c1, %c0_48, %c0_49] : memref<1x42x32x8xf32, #tpu.memory_space<vmem>>, vector<1x1x32x8xf32>
    %83 = vector.shape_cast %82 : vector<1x1x32x8xf32> to vector<32x8xf32>
    %84 = arith.index_cast %c0_i32 : i32 to index
    %c7 = arith.constant 7 : index
    %c0_50 = arith.constant 0 : index
    %c0_51 = arith.constant 0 : index
    %85 = vector.load %arg1[%84, %c7, %c0_50, %c0_51] : memref<1x42x32x8xf32, #tpu.memory_space<vmem>>, vector<1x1x32x8xf32>
    %86 = vector.shape_cast %85 : vector<1x1x32x8xf32> to vector<32x8xf32>
    %87 = arith.index_cast %c0_i32 : i32 to index
    %c13 = arith.constant 13 : index
    %c0_52 = arith.constant 0 : index
    %c0_53 = arith.constant 0 : index
    %88 = vector.load %arg1[%87, %c13, %c0_52, %c0_53] : memref<1x42x32x8xf32, #tpu.memory_space<vmem>>, vector<1x1x32x8xf32>
    %89 = vector.shape_cast %88 : vector<1x1x32x8xf32> to vector<32x8xf32>
    %90 = arith.index_cast %c0_i32 : i32 to index
    %c19 = arith.constant 19 : index
    %c0_54 = arith.constant 0 : index
    %c0_55 = arith.constant 0 : index
    %91 = vector.load %arg1[%90, %c19, %c0_54, %c0_55] : memref<1x42x32x8xf32, #tpu.memory_space<vmem>>, vector<1x1x32x8xf32>
    %92 = vector.shape_cast %91 : vector<1x1x32x8xf32> to vector<32x8xf32>
    %93 = arith.index_cast %c0_i32 : i32 to index
    %c25 = arith.constant 25 : index
    %c0_56 = arith.constant 0 : index
    %c0_57 = arith.constant 0 : index
    %94 = vector.load %arg1[%93, %c25, %c0_56, %c0_57] : memref<1x42x32x8xf32, #tpu.memory_space<vmem>>, vector<1x1x32x8xf32>
    %95 = vector.shape_cast %94 : vector<1x1x32x8xf32> to vector<32x8xf32>
    %96 = arith.index_cast %c0_i32 : i32 to index
    %c31 = arith.constant 31 : index
    %c0_58 = arith.constant 0 : index
    %c0_59 = arith.constant 0 : index
    %97 = vector.load %arg1[%96, %c31, %c0_58, %c0_59] : memref<1x42x32x8xf32, #tpu.memory_space<vmem>>, vector<1x1x32x8xf32>
    %98 = vector.shape_cast %97 : vector<1x1x32x8xf32> to vector<32x8xf32>
    %99 = arith.index_cast %c0_i32 : i32 to index
    %c37 = arith.constant 37 : index
    %c0_60 = arith.constant 0 : index
    %c0_61 = arith.constant 0 : index
    %100 = vector.load %arg1[%99, %c37, %c0_60, %c0_61] : memref<1x42x32x8xf32, #tpu.memory_space<vmem>>, vector<1x1x32x8xf32>
    %101 = vector.shape_cast %100 : vector<1x1x32x8xf32> to vector<32x8xf32>
    %102 = tpu.concatenate %83, %86, %89, %92, %95, %98, %101 in 0 : vector<32x8xf32>, vector<32x8xf32>, vector<32x8xf32>, vector<32x8xf32>, vector<32x8xf32>, vector<32x8xf32>, vector<32x8xf32> -> vector<224x8xf32>
    %103 = tpu.transpose %102, [1, 0] : vector<224x8xf32> -> vector<8x224xf32>
    %104 = arith.index_cast %c0_i32 : i32 to index
    %c24_62 = arith.constant 24 : index
    %c0_63 = arith.constant 0 : index
    %105 = vector.load %arg2[%104, %c24_62, %c0_63] : memref<1x48x224xf32, #tpu.memory_space<vmem>>, vector<1x8x224xf32>
    %106 = vector.shape_cast %105 : vector<1x8x224xf32> to vector<8x224xf32>
    %107 = vector.shape_cast %103 : vector<8x224xf32> to vector<1x8x224xf32>
    tpu.vector_store %arg2[%104, %c24_62, %c0_63], %107 {strides = array<i32>} : memref<1x48x224xf32, #tpu.memory_space<vmem>>, vector<1x8x224xf32>,
    %108 = arith.index_cast %c0_i32 : i32 to index
    %c3 = arith.constant 3 : index
    %c0_64 = arith.constant 0 : index
    %c0_65 = arith.constant 0 : index
    %109 = vector.load %arg1[%108, %c3, %c0_64, %c0_65] : memref<1x42x32x8xf32, #tpu.memory_space<vmem>>, vector<1x1x32x8xf32>
    %110 = vector.shape_cast %109 : vector<1x1x32x8xf32> to vector<32x8xf32>
    %111 = arith.index_cast %c0_i32 : i32 to index
    %c9 = arith.constant 9 : index
    %c0_66 = arith.constant 0 : index
    %c0_67 = arith.constant 0 : index
    %112 = vector.load %arg1[%111, %c9, %c0_66, %c0_67] : memref<1x42x32x8xf32, #tpu.memory_space<vmem>>, vector<1x1x32x8xf32>
    %113 = vector.shape_cast %112 : vector<1x1x32x8xf32> to vector<32x8xf32>
    %114 = arith.index_cast %c0_i32 : i32 to index
    %c15 = arith.constant 15 : index
    %c0_68 = arith.constant 0 : index
    %c0_69 = arith.constant 0 : index
    %115 = vector.load %arg1[%114, %c15, %c0_68, %c0_69] : memref<1x42x32x8xf32, #tpu.memory_space<vmem>>, vector<1x1x32x8xf32>
    %116 = vector.shape_cast %115 : vector<1x1x32x8xf32> to vector<32x8xf32>
    %117 = arith.index_cast %c0_i32 : i32 to index
    %c21 = arith.constant 21 : index
    %c0_70 = arith.constant 0 : index
    %c0_71 = arith.constant 0 : index
    %118 = vector.load %arg1[%117, %c21, %c0_70, %c0_71] : memref<1x42x32x8xf32, #tpu.memory_space<vmem>>, vector<1x1x32x8xf32>
    %119 = vector.shape_cast %118 : vector<1x1x32x8xf32> to vector<32x8xf32>
    %120 = arith.index_cast %c0_i32 : i32 to index
    %c27 = arith.constant 27 : index
    %c0_72 = arith.constant 0 : index
    %c0_73 = arith.constant 0 : index
    %121 = vector.load %arg1[%120, %c27, %c0_72, %c0_73] : memref<1x42x32x8xf32, #tpu.memory_space<vmem>>, vector<1x1x32x8xf32>
    %122 = vector.shape_cast %121 : vector<1x1x32x8xf32> to vector<32x8xf32>
    %123 = arith.index_cast %c0_i32 : i32 to index
    %c33 = arith.constant 33 : index
    %c0_74 = arith.constant 0 : index
    %c0_75 = arith.constant 0 : index
    %124 = vector.load %arg1[%123, %c33, %c0_74, %c0_75] : memref<1x42x32x8xf32, #tpu.memory_space<vmem>>, vector<1x1x32x8xf32>
    %125 = vector.shape_cast %124 : vector<1x1x32x8xf32> to vector<32x8xf32>
    %126 = arith.index_cast %c0_i32 : i32 to index
    %c39 = arith.constant 39 : index
    %c0_76 = arith.constant 0 : index
    %c0_77 = arith.constant 0 : index
    %127 = vector.load %arg1[%126, %c39, %c0_76, %c0_77] : memref<1x42x32x8xf32, #tpu.memory_space<vmem>>, vector<1x1x32x8xf32>
    %128 = vector.shape_cast %127 : vector<1x1x32x8xf32> to vector<32x8xf32>
    %129 = tpu.concatenate %110, %113, %116, %119, %122, %125, %128 in 0 : vector<32x8xf32>, vector<32x8xf32>, vector<32x8xf32>, vector<32x8xf32>, vector<32x8xf32>, vector<32x8xf32>, vector<32x8xf32> -> vector<224x8xf32>
    %130 = tpu.transpose %129, [1, 0] : vector<224x8xf32> -> vector<8x224xf32>
    %131 = arith.index_cast %c0_i32 : i32 to index
    %c32_78 = arith.constant 32 : index
    %c0_79 = arith.constant 0 : index
    %132 = vector.load %arg2[%131, %c32_78, %c0_79] : memref<1x48x224xf32, #tpu.memory_space<vmem>>, vector<1x8x224xf32>
    %133 = vector.shape_cast %132 : vector<1x8x224xf32> to vector<8x224xf32>
    %134 = vector.shape_cast %130 : vector<8x224xf32> to vector<1x8x224xf32>
    tpu.vector_store %arg2[%131, %c32_78, %c0_79], %134 {strides = array<i32>} : memref<1x48x224xf32, #tpu.memory_space<vmem>>, vector<1x8x224xf32>,
    %135 = arith.index_cast %c0_i32 : i32 to index
    %c5 = arith.constant 5 : index
    %c0_80 = arith.constant 0 : index
    %c0_81 = arith.constant 0 : index
    %136 = vector.load %arg1[%135, %c5, %c0_80, %c0_81] : memref<1x42x32x8xf32, #tpu.memory_space<vmem>>, vector<1x1x32x8xf32>
    %137 = vector.shape_cast %136 : vector<1x1x32x8xf32> to vector<32x8xf32>
    %138 = arith.index_cast %c0_i32 : i32 to index
    %c11 = arith.constant 11 : index
    %c0_82 = arith.constant 0 : index
    %c0_83 = arith.constant 0 : index
    %139 = vector.load %arg1[%138, %c11, %c0_82, %c0_83] : memref<1x42x32x8xf32, #tpu.memory_space<vmem>>, vector<1x1x32x8xf32>
    %140 = vector.shape_cast %139 : vector<1x1x32x8xf32> to vector<32x8xf32>
    %141 = arith.index_cast %c0_i32 : i32 to index
    %c17 = arith.constant 17 : index
    %c0_84 = arith.constant 0 : index
    %c0_85 = arith.constant 0 : index
    %142 = vector.load %arg1[%141, %c17, %c0_84, %c0_85] : memref<1x42x32x8xf32, #tpu.memory_space<vmem>>, vector<1x1x32x8xf32>
    %143 = vector.shape_cast %142 : vector<1x1x32x8xf32> to vector<32x8xf32>
    %144 = arith.index_cast %c0_i32 : i32 to index
    %c23 = arith.constant 23 : index
    %c0_86 = arith.constant 0 : index
    %c0_87 = arith.constant 0 : index
    %145 = vector.load %arg1[%144, %c23, %c0_86, %c0_87] : memref<1x42x32x8xf32, #tpu.memory_space<vmem>>, vector<1x1x32x8xf32>
    %146 = vector.shape_cast %145 : vector<1x1x32x8xf32> to vector<32x8xf32>
    %147 = arith.index_cast %c0_i32 : i32 to index
    %c29 = arith.constant 29 : index
    %c0_88 = arith.constant 0 : index
    %c0_89 = arith.constant 0 : index
    %148 = vector.load %arg1[%147, %c29, %c0_88, %c0_89] : memref<1x42x32x8xf32, #tpu.memory_space<vmem>>, vector<1x1x32x8xf32>
    %149 = vector.shape_cast %148 : vector<1x1x32x8xf32> to vector<32x8xf32>
    %150 = arith.index_cast %c0_i32 : i32 to index
    %c35 = arith.constant 35 : index
    %c0_90 = arith.constant 0 : index
    %c0_91 = arith.constant 0 : index
    %151 = vector.load %arg1[%150, %c35, %c0_90, %c0_91] : memref<1x42x32x8xf32, #tpu.memory_space<vmem>>, vector<1x1x32x8xf32>
    %152 = vector.shape_cast %151 : vector<1x1x32x8xf32> to vector<32x8xf32>
    %153 = arith.index_cast %c0_i32 : i32 to index
    %c41 = arith.constant 41 : index
    %c0_92 = arith.constant 0 : index
    %c0_93 = arith.constant 0 : index
    %154 = vector.load %arg1[%153, %c41, %c0_92, %c0_93] : memref<1x42x32x8xf32, #tpu.memory_space<vmem>>, vector<1x1x32x8xf32>
    %155 = vector.shape_cast %154 : vector<1x1x32x8xf32> to vector<32x8xf32>
    %156 = tpu.concatenate %137, %140, %143, %146, %149, %152, %155 in 0 : vector<32x8xf32>, vector<32x8xf32>, vector<32x8xf32>, vector<32x8xf32>, vector<32x8xf32>, vector<32x8xf32>, vector<32x8xf32> -> vector<224x8xf32>
    %157 = tpu.transpose %156, [1, 0] : vector<224x8xf32> -> vector<8x224xf32>
    %158 = arith.index_cast %c0_i32 : i32 to index
    %c40_94 = arith.constant 40 : index
    %c0_95 = arith.constant 0 : index
    %159 = vector.load %arg2[%158, %c40_94, %c0_95] : memref<1x48x224xf32, #tpu.memory_space<vmem>>, vector<1x8x224xf32>
    %160 = vector.shape_cast %159 : vector<1x8x224xf32> to vector<8x224xf32>
    %161 = vector.shape_cast %157 : vector<8x224xf32> to vector<1x8x224xf32>
    tpu.vector_store %arg2[%158, %c40_94, %c0_95], %161 {strides = array<i32>} : memref<1x48x224xf32, #tpu.memory_space<vmem>>, vector<1x8x224xf32>,
    %c1_i32 = arith.constant 1 : i32
    return
  }
  func.func @transform_0(%arg0: i32) -> (i32, i32, i32, i32) {
    %c0_i32 = arith.constant 0 : i32
    %c0_i32_0 = arith.constant 0 : i32
    %c0_i32_1 = arith.constant 0 : i32
    %c0_i32_2 = arith.constant 0 : i32
    return %arg0, %c0_i32, %c0_i32_0, %c0_i32_1 : i32, i32, i32, i32
  }
  func.func @transform_1(%arg0: i32) -> (i32, i32, i32) {
    %c0_i32 = arith.constant 0 : i32
    %c0_i32_0 = arith.constant 0 : i32
    %c0_i32_1 = arith.constant 0 : i32
    return %arg0, %c0_i32, %c0_i32_0 : i32, i32, i32
  }
}

</mosaic_0001>

<llo_original>
// kernel: tpu_custom_call.1
$region0: #{tpu_custom_call.1}
  #allocation0 [shape = 'u32[]', space=smem, size = 0x4, offset = 0x4, fixed_abs, tag = 'smem constant byte address 0x4 - core index']
  #allocation1 [shape = 'u32[144,128]{1,0:T(1,128)}', space=vmem, size = 0x12000, scoped, tag = 'internal scratch']
  %s0 = inlined_call_operand.vmem [shape: f32[2,42,32,8], index: 0, kind: input, shape index: {}]
  %s1 = inlined_call_operand.hbm [shape: f32[2,48,224], index: 1, kind: output, shape index: {}]
  %s2 = sld [smem:[#allocation0]]
  $region37: #{tpu_custom_call.1} parent=0
    _
  %s4 = ssub.s32 1, %s2
  %s5 = scalar_select 0, %s4, %s2
  $region1: #{tpu_custom_call.1} parent=0
    #allocation2 [shape = 'u8[98304]{0}', space=vmem, size = 0x18000, scoped, tag = 'output window, operand 0']
    #allocation3 [shape = 's32[2]{0}', space=sflag, size = 0x8, scoped, tag = 'scoped memory for tpu_custom_call.1']
    %6 = vsyncpa [#allocation3], 0
    %s7 = scalar_lea.sflag [#allocation3], 1
    %8 = vsyncpa %s7, 0
    loop: start=0, step=1, limit=4
    $region2: #{tpu_custom_call.1} parent=1 // loop_pre_header
      _
    $region3: #{tpu_custom_call.1} parent=1 // loop_header
      %s10 = sphi 0, %s14
      %p11 = scmp.ge.s32.totalorder %s10, 4
      %s20 = sphi 0, %s22
      %s23 = sphi 0, %s20
      %s24 = sphi 0, %s23
      %s40 = sphi 0, %s24
      %s46 = sphi 0, %s48
      %s49 = sphi 0, %s46
      %s50 = sphi 0, %s49
      %s66 = sphi 0, %s50
    $region4: #{tpu_custom_call.1} parent=1 // loop_header_branch
      %13 = sbr.rel (%p11) target = $region8
    $region5: #{tpu_custom_call.1} parent=1 // loop_body
      %s15 = ssub.s32 %s10, 1
      %s16 = ssub.s32 %s10, 2
      %s17 = sadd.s32 %s10, 1
      %s18 = ssub.s32 %s10, %s17
      %p19 = scmp.eq.s32.totalorder %s18, 0
      %s21 = sadd.s32 %s20, 1
      %s22 = scalar_select %p19, %s20, %s21
      %p25 = pneg %p19
      %p26 = scmp.eq.s32.totalorder %s10, 1
      %p27 = por %p25, %p26
      %p28 = scmp.ne.s32.totalorder %s20, %s23
      %p29 = scmp.eq.s32.totalorder %s10, 0
      %p30 = por %p28, %p29
      %p31 = scmp.ne.s32.totalorder %s20, %s23
      %p32 = scmp.eq.s32.totalorder %s15, 1
      %p33 = por %p31, %p32
      %p34 = scmp.ne.s32.totalorder %s23, %s24
      %p35 = scmp.eq.s32.totalorder %s15, 0
      %p36 = por %p34, %p35
      %p37 = scmp.ne.s32.totalorder %s23, %s24
      %p38 = scmp.eq.s32.totalorder %s16, 1
      %p39 = por %p37, %p38
      %p41 = scmp.ne.s32.totalorder %s24, %s40
      %p42 = scmp.eq.s32.totalorder %s16, 0
      %p43 = por %p41, %p42
      %s44 = ssub.s32 %s10, %s17
      %p45 = scmp.eq.s32.totalorder %s44, 0
      %s47 = sadd.s32 %s46, 1
      %s48 = scalar_select %p45, %s46, %s47
      %p51 = pneg %p45
      %p52 = scmp.eq.s32.totalorder %s10, 1
      %p53 = por %p51, %p52
      %p54 = scmp.ne.s32.totalorder %s46, %s49
      %p55 = scmp.eq.s32.totalorder %s10, 0
      %p56 = por %p54, %p55
      %p57 = scmp.ne.s32.totalorder %s46, %s49
      %p58 = scmp.eq.s32.totalorder %s15, 1
      %p59 = por %p57, %p58
      %p60 = scmp.ne.s32.totalorder %s49, %s50
      %p61 = scmp.eq.s32.totalorder %s15, 0
      %p62 = por %p60, %p61
      %p63 = scmp.ne.s32.totalorder %s49, %s50
      %p64 = scmp.eq.s32.totalorder %s16, 1
      %p65 = por %p63, %p64
      %p67 = scmp.ne.s32.totalorder %s50, %s66
      %p68 = scmp.eq.s32.totalorder %s16, 0
      %p69 = por %p67, %p68
      %p70 = scmp.le.s32.totalorder 1, %s10
      %p71 = scmp.lt.s32.totalorder %s10, 3
      %p72 = pnand %p70, %p71
      %p73 = pneg %p72
      // Predicated region
      $region9: #{tpu_custom_call.1} parent=5 // pred_check
        _
      $region10: #{tpu_custom_call.1} parent=5 // pred_check_branch
        %75 = sbr.rel (%p72) target = $region12
      $region11: #{tpu_custom_call.1} parent=5 // pred_region
        %s76 = ssub.s32 %s10, 1
      $region12: #{tpu_custom_call.1} parent=5 // pred_fallthru
        _
      %p77 = scmp.lt.s32.totalorder %s10, 2
      // Predicated region
      $region13: #{tpu_custom_call.1} parent=5 // pred_check
        %p78 = pneg %p77
      $region14: #{tpu_custom_call.1} parent=5 // pred_check_branch
        %80 = sbr.rel (%p78) target = $region16
      $region15: #{tpu_custom_call.1} parent=5 // pred_region
        // Predicated region
        $region17: #{tpu_custom_call.1} parent=15 // pred_check
          %p81 = pneg %p30
        $region18: #{tpu_custom_call.1} parent=15 // pred_check_branch
          %83 = sbr.rel (%p81) target = $region20
        $region19: #{tpu_custom_call.1} parent=15 // pred_region
          %p84 = scmp.lt.s32.totalorder %s10, 1
          %s85 = scalar_select %p84, %s10, 1
          %s86 = smul.addr %s85, 168
          %s87 = smul.addr %s86, 8
          %s88 = scalar_lea.vmem %s0, %s87
        $region20: #{tpu_custom_call.1} parent=15 // pred_fallthru
          _
      $region16: #{tpu_custom_call.1} parent=5 // pred_fallthru
        _
      %p89 = scmp.le.s32.totalorder 1, %s10
      %p90 = scmp.lt.s32.totalorder %s10, 3
      %p91 = pnand %p89, %p90
      %p92 = pneg %p91
      // Predicated region
      $region21: #{tpu_custom_call.1} parent=5 // pred_check
        _
      $region22: #{tpu_custom_call.1} parent=5 // pred_check_branch
        %94 = sbr.rel (%p91) target = $region24
      $region23: #{tpu_custom_call.1} parent=5 // pred_region
        %s95 = ssub.s32 %s10, 1
        %p96 = scmp.lt.s32.totalorder %s15, 1
        %s97 = scalar_select %p96, %s15, 1
        %s98 = smul.addr %s97, 168
        %s99 = smul.addr %s98, 8
        %s100 = scalar_lea.vmem %s0, %s99
        %p101 = pneg %p36
        %p102 = pneg %p33
        %p103 = pneg %p62
        %p104 = pneg %p59
        %s105 = sand.u32 %s49, 1
        %s106 = scalar_lea.sflag [#allocation3], %s105
        %s107 = sand.u32 %s49, 1
        %s108 = smul.addr %s107, 96
        %s109 = scalar_lea.vmem [#allocation2], %s108
        %p110 = scmp.lt.s32.totalorder %s15, 1
        %s111 = scalar_select %p110, %s15, 1
        %s112 = smul.addr %s111, 168
        %s113 = smul.addr %s112, 8
        %s114 = scalar_lea.vmem %s0, %s113
        %v115 = vld [vmem:[%s114] sm:$0xff]
        %v116 = vld [vmem:[%s114 + $0x8] sm:$0xff]
        %v117 = vld [vmem:[%s114 + $0x10] sm:$0xff]
        %v118 = vld [vmem:[%s114 + $0x18] sm:$0xff]
        %s119 = scalar_lea.vmem %s114, 192
        %v120 = vld [vmem:[%s119] sm:$0xff]
        %v121 = vld [vmem:[%s119 + $0x8] sm:$0xff]
        %v122 = vld [vmem:[%s119 + $0x10] sm:$0xff]
        %v123 = vld [vmem:[%s119 + $0x18] sm:$0xff]
        %s124 = scalar_lea.vmem %s114, 384
        %v125 = vld [vmem:[%s124] sm:$0xff]
        %v126 = vld [vmem:[%s124 + $0x8] sm:$0xff]
        %v127 = vld [vmem:[%s124 + $0x10] sm:$0xff]
        %v128 = vld [vmem:[%s124 + $0x18] sm:$0xff]
        %s129 = scalar_lea.vmem %s114, 576
        %v130 = vld [vmem:[%s129] sm:$0xff]
        %v131 = vld [vmem:[%s129 + $0x8] sm:$0xff]
        %v132 = vld [vmem:[%s129 + $0x10] sm:$0xff]
        %v133 = vld [vmem:[%s129 + $0x18] sm:$0xff]
        %s134 = scalar_lea.vmem %s114, 768
        %v135 = vld [vmem:[%s134] sm:$0xff]
        %v136 = vld [vmem:[%s134 + $0x8] sm:$0xff]
        %v137 = vld [vmem:[%s134 + $0x10] sm:$0xff]
        %v138 = vld [vmem:[%s134 + $0x18] sm:$0xff]
        %s139 = scalar_lea.vmem %s114, 960
        %v140 = vld [vmem:[%s139] sm:$0xff]
        %v141 = vld [vmem:[%s139 + $0x8] sm:$0xff]
        %v142 = vld [vmem:[%s139 + $0x10] sm:$0xff]
        %v143 = vld [vmem:[%s139 + $0x18] sm:$0xff]
        %s144 = scalar_lea.vmem %s114, 1152
        %v145 = vld [vmem:[%s144] sm:$0xff]
        %v146 = vld [vmem:[%s144 + $0x8] sm:$0xff]
        %v147 = vld [vmem:[%s144 + $0x10] sm:$0xff]
        %v148 = vld [vmem:[%s144 + $0x18] sm:$0xff]
        %149 = vxpose.xlu0.b32.start [1/16] %v115, 128
        %150 = vxpose.xlu0.b32.cont [2/16] %v116, 128
        %151 = vxpose.xlu0.b32.cont [3/16] %v117, 128
        %152 = vxpose.xlu0.b32.cont [4/16] %v118, 128
        %153 = vxpose.xlu0.b32.cont [5/16] %v120, 128
        %154 = vxpose.xlu0.b32.cont [6/16] %v121, 128
        %155 = vxpose.xlu0.b32.cont [7/16] %v122, 128
        %156 = vxpose.xlu0.b32.cont [8/16] %v123, 128
        %157 = vxpose.xlu0.b32.cont [9/16] %v125, 128
        %158 = vxpose.xlu0.b32.cont [10/16] %v126, 128
        %159 = vxpose.xlu0.b32.cont [11/16] %v127, 128
        %160 = vxpose.xlu0.b32.cont [12/16] %v128, 128
        %161 = vxpose.xlu0.b32.cont [13/16] %v130, 128
        %162 = vxpose.xlu0.b32.cont [14/16] %v131, 128
        %163 = vxpose.xlu0.b32.cont [15/16] %v132, 128
        %164 = vxpose.xlu0.b32.end [16/16] %v133, 128
        %v165 = vpop.trf.xlu0
        %v166 = vpop.trf.xlu0
        %v167 = vpop.trf.xlu0
        %v168 = vpop.trf.xlu0
        %v169 = vpop.trf.xlu0
        %v170 = vpop.trf.xlu0
        %v171 = vpop.trf.xlu0
        %v172 = vpop.trf.xlu0
        %v173 = vpop.trf.xlu0
        %v174 = vpop.trf.xlu0
        %v175 = vpop.trf.xlu0
        %v176 = vpop.trf.xlu0
        %v177 = vpop.trf.xlu0
        %v178 = vpop.trf.xlu0
        %v179 = vpop.trf.xlu0
        %v180 = vpop.trf.xlu0
        %181 = vxpose.xlu0.b32.start [1/16] %v135, 128
        %182 = vxpose.xlu0.b32.cont [2/16] %v136, 128
        %183 = vxpose.xlu0.b32.cont [3/16] %v137, 128
        %184 = vxpose.xlu0.b32.cont [4/16] %v138, 128
        %185 = vxpose.xlu0.b32.cont [5/16] %v140, 128
        %186 = vxpose.xlu0.b32.cont [6/16] %v141, 128
        %187 = vxpose.xlu0.b32.cont [7/16] %v142, 128
        %188 = vxpose.xlu0.b32.cont [8/16] %v143, 128
        %189 = vxpose.xlu0.b32.cont [9/16] %v145, 128
        %190 = vxpose.xlu0.b32.cont [10/16] %v146, 128
        %191 = vxpose.xlu0.b32.cont [11/16] %v147, 128
        %192 = vxpose.xlu0.b32.cont [12/16] %v148, 128
        %193 = vxpose.xlu0.b32.cont [13/16] 0.0, 128
        %194 = vxpose.xlu0.b32.cont [14/16] 0.0, 128
        %195 = vxpose.xlu0.b32.cont [15/16] 0.0, 128
        %196 = vxpose.xlu0.b32.end [16/16] 0.0, 128
        %v197 = vpop.trf.xlu0
        %v198 = vpop.trf.xlu0
        %v199 = vpop.trf.xlu0
        %v200 = vpop.trf.xlu0
        %v201 = vpop.trf.xlu0
        %v202 = vpop.trf.xlu0
        %v203 = vpop.trf.xlu0
        %v204 = vpop.trf.xlu0
        %v205 = vpop.trf.xlu0
        %v206 = vpop.trf.xlu0
        %v207 = vpop.trf.xlu0
        %v208 = vpop.trf.xlu0
        %v209 = vpop.trf.xlu0
        %v210 = vpop.trf.xlu0
        %v211 = vpop.trf.xlu0
        %v212 = vpop.trf.xlu0
        %213 = vst [vmem:[%s109] sm:$0xff] %v165
        %vm214 = vcmask 785408
        %215 = vst.msk [vmem:[%s109 + $0x8] sm:$0xff] %vm214, %v197
        %s216 = scalar_lea.vmem %s114, 64
        %v217 = vld [vmem:[%s216] sm:$0xff]
        %v218 = vld [vmem:[%s216 + $0x8] sm:$0xff]
        %v219 = vld [vmem:[%s216 + $0x10] sm:$0xff]
        %v220 = vld [vmem:[%s216 + $0x18] sm:$0xff]
        %s221 = scalar_lea.vmem %s114, 256
        %v222 = vld [vmem:[%s221] sm:$0xff]
        %v223 = vld [vmem:[%s221 + $0x8] sm:$0xff]
        %v224 = vld [vmem:[%s221 + $0x10] sm:$0xff]
        %v225 = vld [vmem:[%s221 + $0x18] sm:$0xff]
        %s226 = scalar_lea.vmem %s114, 448
        %v227 = vld [vmem:[%s226] sm:$0xff]
        %v228 = vld [vmem:[%s226 + $0x8] sm:$0xff]
        %v229 = vld [vmem:[%s226 + $0x10] sm:$0xff]
        %v230 = vld [vmem:[%s226 + $0x18] sm:$0xff]
        %s231 = scalar_lea.vmem %s114, 640
        %v232 = vld [vmem:[%s231] sm:$0xff]
        %v233 = vld [vmem:[%s231 + $0x8] sm:$0xff]
        %v234 = vld [vmem:[%s231 + $0x10] sm:$0xff]
        %v235 = vld [vmem:[%s231 + $0x18] sm:$0xff]
        %s236 = scalar_lea.vmem %s114, 832
        %v237 = vld [vmem:[%s236] sm:$0xff]
        %v238 = vld [vmem:[%s236 + $0x8] sm:$0xff]
        %v239 = vld [vmem:[%s236 + $0x10] sm:$0xff]
        %v240 = vld [vmem:[%s236 + $0x18] sm:$0xff]
        %s241 = scalar_lea.vmem %s114, 1024
        %v242 = vld [vmem:[%s241] sm:$0xff]
        %v243 = vld [vmem:[%s241 + $0x8] sm:$0xff]
        %v244 = vld [vmem:[%s241 + $0x10] sm:$0xff]
        %v245 = vld [vmem:[%s241 + $0x18] sm:$0xff]
        %s246 = scalar_lea.vmem %s114, 1216
        %v247 = vld [vmem:[%s246] sm:$0xff]
        %v248 = vld [vmem:[%s246 + $0x8] sm:$0xff]
        %v249 = vld [vmem:[%s246 + $0x10] sm:$0xff]
        %v250 = vld [vmem:[%s246 + $0x18] sm:$0xff]
        %251 = vxpose.xlu0.b32.start [1/16] %v217, 128
        %252 = vxpose.xlu0.b32.cont [2/16] %v218, 128
        %253 = vxpose.xlu0.b32.cont [3/16] %v219, 128
        %254 = vxpose.xlu0.b32.cont [4/16] %v220, 128
        %255 = vxpose.xlu0.b32.cont [5/16] %v222, 128
        %256 = vxpose.xlu0.b32.cont [6/16] %v223, 128
        %257 = vxpose.xlu0.b32.cont [7/16] %v224, 128
        %258 = vxpose.xlu0.b32.cont [8/16] %v225, 128
        %259 = vxpose.xlu0.b32.cont [9/16] %v227, 128
        %260 = vxpose.xlu0.b32.cont [10/16] %v228, 128
        %261 = vxpose.xlu0.b32.cont [11/16] %v229, 128
        %262 = vxpose.xlu0.b32.cont [12/16] %v230, 128
        %263 = vxpose.xlu0.b32.cont [13/16] %v232, 128
        %264 = vxpose.xlu0.b32.cont [14/16] %v233, 128
        %265 = vxpose.xlu0.b32.cont [15/16] %v234, 128
        %266 = vxpose.xlu0.b32.end [16/16] %v235, 128
        %v267 = vpop.trf.xlu0
        %v268 = vpop.trf.xlu0
        %v269 = vpop.trf.xlu0
        %v270 = vpop.trf.xlu0
        %v271 = vpop.trf.xlu0
        %v272 = vpop.trf.xlu0
        %v273 = vpop.trf.xlu0
        %v274 = vpop.trf.xlu0
        %v275 = vpop.trf.xlu0
        %v276 = vpop.trf.xlu0
        %v277 = vpop.trf.xlu0
        %v278 = vpop.trf.xlu0
        %v279 = vpop.trf.xlu0
        %v280 = vpop.trf.xlu0
        %v281 = vpop.trf.xlu0
        %v282 = vpop.trf.xlu0
        %283 = vxpose.xlu0.b32.start [1/16] %v237, 128
        %284 = vxpose.xlu0.b32.cont [2/16] %v238, 128
        %285 = vxpose.xlu0.b32.cont [3/16] %v239, 128
        %286 = vxpose.xlu0.b32.cont [4/16] %v240, 128
        %287 = vxpose.xlu0.b32.cont [5/16] %v242, 128
        %288 = vxpose.xlu0.b32.cont [6/16] %v243, 128
        %289 = vxpose.xlu0.b32.cont [7/16] %v244, 128
        %290 = vxpose.xlu0.b32.cont [8/16] %v245, 128
        %291 = vxpose.xlu0.b32.cont [9/16] %v247, 128
        %292 = vxpose.xlu0.b32.cont [10/16] %v248, 128
        %293 = vxpose.xlu0.b32.cont [11/16] %v249, 128
        %294 = vxpose.xlu0.b32.cont [12/16] %v250, 128
        %295 = vxpose.xlu0.b32.cont [13/16] 0.0, 128
        %296 = vxpose.xlu0.b32.cont [14/16] 0.0, 128
        %297 = vxpose.xlu0.b32.cont [15/16] 0.0, 128
        %298 = vxpose.xlu0.b32.end [16/16] 0.0, 128
        %v299 = vpop.trf.xlu0
        %v300 = vpop.trf.xlu0
        %v301 = vpop.trf.xlu0
        %v302 = vpop.trf.xlu0
        %v303 = vpop.trf.xlu0
        %v304 = vpop.trf.xlu0
        %v305 = vpop.trf.xlu0
        %v306 = vpop.trf.xlu0
        %v307 = vpop.trf.xlu0
        %v308 = vpop.trf.xlu0
        %v309 = vpop.trf.xlu0
        %v310 = vpop.trf.xlu0
        %v311 = vpop.trf.xlu0
        %v312 = vpop.trf.xlu0
        %v313 = vpop.trf.xlu0
        %v314 = vpop.trf.xlu0
        %315 = vst [vmem:[%s109 + $0x10] sm:$0xff] %v267
        %316 = vst.msk [vmem:[%s109 + $0x18] sm:$0xff] %vm214, %v299
        %s317 = scalar_lea.vmem %s114, 128
        %v318 = vld [vmem:[%s317] sm:$0xff]
        %v319 = vld [vmem:[%s317 + $0x8] sm:$0xff]
        %v320 = vld [vmem:[%s317 + $0x10] sm:$0xff]
        %v321 = vld [vmem:[%s317 + $0x18] sm:$0xff]
        %s322 = scalar_lea.vmem %s114, 320
        %v323 = vld [vmem:[%s322] sm:$0xff]
        %v324 = vld [vmem:[%s322 + $0x8] sm:$0xff]
        %v325 = vld [vmem:[%s322 + $0x10] sm:$0xff]
        %v326 = vld [vmem:[%s322 + $0x18] sm:$0xff]
        %s327 = scalar_lea.vmem %s114, 512
        %v328 = vld [vmem:[%s327] sm:$0xff]
        %v329 = vld [vmem:[%s327 + $0x8] sm:$0xff]
        %v330 = vld [vmem:[%s327 + $0x10] sm:$0xff]
        %v331 = vld [vmem:[%s327 + $0x18] sm:$0xff]
        %s332 = scalar_lea.vmem %s114, 704
        %v333 = vld [vmem:[%s332] sm:$0xff]
        %v334 = vld [vmem:[%s332 + $0x8] sm:$0xff]
        %v335 = vld [vmem:[%s332 + $0x10] sm:$0xff]
        %v336 = vld [vmem:[%s332 + $0x18] sm:$0xff]
        %s337 = scalar_lea.vmem %s114, 896
        %v338 = vld [vmem:[%s337] sm:$0xff]
        %v339 = vld [vmem:[%s337 + $0x8] sm:$0xff]
        %v340 = vld [vmem:[%s337 + $0x10] sm:$0xff]
        %v341 = vld [vmem:[%s337 + $0x18] sm:$0xff]
        %s342 = scalar_lea.vmem %s114, 1088
        %v343 = vld [vmem:[%s342] sm:$0xff]
        %v344 = vld [vmem:[%s342 + $0x8] sm:$0xff]
        %v345 = vld [vmem:[%s342 + $0x10] sm:$0xff]
        %v346 = vld [vmem:[%s342 + $0x18] sm:$0xff]
        %s347 = scalar_lea.vmem %s114, 1280
        %v348 = vld [vmem:[%s347] sm:$0xff]
        %v349 = vld [vmem:[%s347 + $0x8] sm:$0xff]
        %v350 = vld [vmem:[%s347 + $0x10] sm:$0xff]
        %v351 = vld [vmem:[%s347 + $0x18] sm:$0xff]
        %352 = vxpose.xlu0.b32.start [1/16] %v318, 128
        %353 = vxpose.xlu0.b32.cont [2/16] %v319, 128
        %354 = vxpose.xlu0.b32.cont [3/16] %v320, 128
        %355 = vxpose.xlu0.b32.cont [4/16] %v321, 128
        %356 = vxpose.xlu0.b32.cont [5/16] %v323, 128
        %357 = vxpose.xlu0.b32.cont [6/16] %v324, 128
        %358 = vxpose.xlu0.b32.cont [7/16] %v325, 128
        %359 = vxpose.xlu0.b32.cont [8/16] %v326, 128
        %360 = vxpose.xlu0.b32.cont [9/16] %v328, 128
        %361 = vxpose.xlu0.b32.cont [10/16] %v329, 128
        %362 = vxpose.xlu0.b32.cont [11/16] %v330, 128
        %363 = vxpose.xlu0.b32.cont [12/16] %v331, 128
        %364 = vxpose.xlu0.b32.cont [13/16] %v333, 128
        %365 = vxpose.xlu0.b32.cont [14/16] %v334, 128
        %366 = vxpose.xlu0.b32.cont [15/16] %v335, 128
        %367 = vxpose.xlu0.b32.end [16/16] %v336, 128
        %v368 = vpop.trf.xlu0
        %v369 = vpop.trf.xlu0
        %v370 = vpop.trf.xlu0
        %v371 = vpop.trf.xlu0
        %v372 = vpop.trf.xlu0
        %v373 = vpop.trf.xlu0
        %v374 = vpop.trf.xlu0
        %v375 = vpop.trf.xlu0
        %v376 = vpop.trf.xlu0
        %v377 = vpop.trf.xlu0
        %v378 = vpop.trf.xlu0
        %v379 = vpop.trf.xlu0
        %v380 = vpop.trf.xlu0
        %v381 = vpop.trf.xlu0
        %v382 = vpop.trf.xlu0
        %v383 = vpop.trf.xlu0
        %384 = vxpose.xlu0.b32.start [1/16] %v338, 128
        %385 = vxpose.xlu0.b32.cont [2/16] %v339, 128
        %386 = vxpose.xlu0.b32.cont [3/16] %v340, 128
        %387 = vxpose.xlu0.b32.cont [4/16] %v341, 128
        %388 = vxpose.xlu0.b32.cont [5/16] %v343, 128
        %389 = vxpose.xlu0.b32.cont [6/16] %v344, 128
        %390 = vxpose.xlu0.b32.cont [7/16] %v345, 128
        %391 = vxpose.xlu0.b32.cont [8/16] %v346, 128
        %392 = vxpose.xlu0.b32.cont [9/16] %v348, 128
        %393 = vxpose.xlu0.b32.cont [10/16] %v349, 128
        %394 = vxpose.xlu0.b32.cont [11/16] %v350, 128
        %395 = vxpose.xlu0.b32.cont [12/16] %v351, 128
        %396 = vxpose.xlu0.b32.cont [13/16] 0.0, 128
        %397 = vxpose.xlu0.b32.cont [14/16] 0.0, 128
        %398 = vxpose.xlu0.b32.cont [15/16] 0.0, 128
        %399 = vxpose.xlu0.b32.end [16/16] 0.0, 128
        %v400 = vpop.trf.xlu0
        %v401 = vpop.trf.xlu0
        %v402 = vpop.trf.xlu0
        %v403 = vpop.trf.xlu0
        %v404 = vpop.trf.xlu0
        %v405 = vpop.trf.xlu0
        %v406 = vpop.trf.xlu0
        %v407 = vpop.trf.xlu0
        %v408 = vpop.trf.xlu0
        %v409 = vpop.trf.xlu0
        %v410 = vpop.trf.xlu0
        %v411 = vpop.trf.xlu0
        %v412 = vpop.trf.xlu0
        %v413 = vpop.trf.xlu0
        %v414 = vpop.trf.xlu0
        %v415 = vpop.trf.xlu0
        %416 = vst [vmem:[%s109 + $0x20] sm:$0xff] %v368
        %417 = vst.msk [vmem:[%s109 + $0x28] sm:$0xff] %vm214, %v400
        %s418 = scalar_lea.vmem %s114, 32
        %v419 = vld [vmem:[%s418] sm:$0xff]
        %v420 = vld [vmem:[%s418 + $0x8] sm:$0xff]
        %v421 = vld [vmem:[%s418 + $0x10] sm:$0xff]
        %v422 = vld [vmem:[%s418 + $0x18] sm:$0xff]
        %s423 = scalar_lea.vmem %s114, 224
        %v424 = vld [vmem:[%s423] sm:$0xff]
        %v425 = vld [vmem:[%s423 + $0x8] sm:$0xff]
        %v426 = vld [vmem:[%s423 + $0x10] sm:$0xff]
        %v427 = vld [vmem:[%s423 + $0x18] sm:$0xff]
        %s428 = scalar_lea.vmem %s114, 416
        %v429 = vld [vmem:[%s428] sm:$0xff]
        %v430 = vld [vmem:[%s428 + $0x8] sm:$0xff]
        %v431 = vld [vmem:[%s428 + $0x10] sm:$0xff]
        %v432 = vld [vmem:[%s428 + $0x18] sm:$0xff]
        %s433 = scalar_lea.vmem %s114, 608
        %v434 = vld [vmem:[%s433] sm:$0xff]
        %v435 = vld [vmem:[%s433 + $0x8] sm:$0xff]
        %v436 = vld [vmem:[%s433 + $0x10] sm:$0xff]
        %v437 = vld [vmem:[%s433 + $0x18] sm:$0xff]
        %s438 = scalar_lea.vmem %s114, 800
        %v439 = vld [vmem:[%s438] sm:$0xff]
        %v440 = vld [vmem:[%s438 + $0x8] sm:$0xff]
        %v441 = vld [vmem:[%s438 + $0x10] sm:$0xff]
        %v442 = vld [vmem:[%s438 + $0x18] sm:$0xff]
        %s443 = scalar_lea.vmem %s114, 992
        %v444 = vld [vmem:[%s443] sm:$0xff]
        %v445 = vld [vmem:[%s443 + $0x8] sm:$0xff]
        %v446 = vld [vmem:[%s443 + $0x10] sm:$0xff]
        %v447 = vld [vmem:[%s443 + $0x18] sm:$0xff]
        %s448 = scalar_lea.vmem %s114, 1184
        %v449 = vld [vmem:[%s448] sm:$0xff]
        %v450 = vld [vmem:[%s448 + $0x8] sm:$0xff]
        %v451 = vld [vmem:[%s448 + $0x10] sm:$0xff]
        %v452 = vld [vmem:[%s448 + $0x18] sm:$0xff]
        %453 = vxpose.xlu0.b32.start [1/16] %v419, 128
        %454 = vxpose.xlu0.b32.cont [2/16] %v420, 128
        %455 = vxpose.xlu0.b32.cont [3/16] %v421, 128
        %456 = vxpose.xlu0.b32.cont [4/16] %v422, 128
        %457 = vxpose.xlu0.b32.cont [5/16] %v424, 128
        %458 = vxpose.xlu0.b32.cont [6/16] %v425, 128
        %459 = vxpose.xlu0.b32.cont [7/16] %v426, 128
        %460 = vxpose.xlu0.b32.cont [8/16] %v427, 128
        %461 = vxpose.xlu0.b32.cont [9/16] %v429, 128
        %462 = vxpose.xlu0.b32.cont [10/16] %v430, 128
        %463 = vxpose.xlu0.b32.cont [11/16] %v431, 128
        %464 = vxpose.xlu0.b32.cont [12/16] %v432, 128
        %465 = vxpose.xlu0.b32.cont [13/16] %v434, 128
        %466 = vxpose.xlu0.b32.cont [14/16] %v435, 128
        %467 = vxpose.xlu0.b32.cont [15/16] %v436, 128
        %468 = vxpose.xlu0.b32.end [16/16] %v437, 128
        %v469 = vpop.trf.xlu0
        %v470 = vpop.trf.xlu0
        %v471 = vpop.trf.xlu0
        %v472 = vpop.trf.xlu0
        %v473 = vpop.trf.xlu0
        %v474 = vpop.trf.xlu0
        %v475 = vpop.trf.xlu0
        %v476 = vpop.trf.xlu0
        %v477 = vpop.trf.xlu0
        %v478 = vpop.trf.xlu0
        %v479 = vpop.trf.xlu0
        %v480 = vpop.trf.xlu0
        %v481 = vpop.trf.xlu0
        %v482 = vpop.trf.xlu0
        %v483 = vpop.trf.xlu0
        %v484 = vpop.trf.xlu0
        %485 = vxpose.xlu0.b32.start [1/16] %v439, 128
        %486 = vxpose.xlu0.b32.cont [2/16] %v440, 128
        %487 = vxpose.xlu0.b32.cont [3/16] %v441, 128
        %488 = vxpose.xlu0.b32.cont [4/16] %v442, 128
        %489 = vxpose.xlu0.b32.cont [5/16] %v444, 128
        %490 = vxpose.xlu0.b32.cont [6/16] %v445, 128
        %491 = vxpose.xlu0.b32.cont [7/16] %v446, 128
        %492 = vxpose.xlu0.b32.cont [8/16] %v447, 128
        %493 = vxpose.xlu0.b32.cont [9/16] %v449, 128
        %494 = vxpose.xlu0.b32.cont [10/16] %v450, 128
        %495 = vxpose.xlu0.b32.cont [11/16] %v451, 128
        %496 = vxpose.xlu0.b32.cont [12/16] %v452, 128
        %497 = vxpose.xlu0.b32.cont [13/16] 0.0, 128
        %498 = vxpose.xlu0.b32.cont [14/16] 0.0, 128
        %499 = vxpose.xlu0.b32.cont [15/16] 0.0, 128
        %500 = vxpose.xlu0.b32.end [16/16] 0.0, 128
        %v501 = vpop.trf.xlu0
        %v502 = vpop.trf.xlu0
        %v503 = vpop.trf.xlu0
        %v504 = vpop.trf.xlu0
        %v505 = vpop.trf.xlu0
        %v506 = vpop.trf.xlu0
        %v507 = vpop.trf.xlu0
        %v508 = vpop.trf.xlu0
        %v509 = vpop.trf.xlu0
        %v510 = vpop.trf.xlu0
        %v511 = vpop.trf.xlu0
        %v512 = vpop.trf.xlu0
        %v513 = vpop.trf.xlu0
        %v514 = vpop.trf.xlu0
        %v515 = vpop.trf.xlu0
        %v516 = vpop.trf.xlu0
        %517 = vst [vmem:[%s109 + $0x30] sm:$0xff] %v469
        %518 = vst.msk [vmem:[%s109 + $0x38] sm:$0xff] %vm214, %v501
        %s519 = scalar_lea.vmem %s114, 96
        %v520 = vld [vmem:[%s519] sm:$0xff]
        %v521 = vld [vmem:[%s519 + $0x8] sm:$0xff]
        %v522 = vld [vmem:[%s519 + $0x10] sm:$0xff]
        %v523 = vld [vmem:[%s519 + $0x18] sm:$0xff]
        %s524 = scalar_lea.vmem %s114, 288
        %v525 = vld [vmem:[%s524] sm:$0xff]
        %v526 = vld [vmem:[%s524 + $0x8] sm:$0xff]
        %v527 = vld [vmem:[%s524 + $0x10] sm:$0xff]
        %v528 = vld [vmem:[%s524 + $0x18] sm:$0xff]
        %s529 = scalar_lea.vmem %s114, 480
        %v530 = vld [vmem:[%s529] sm:$0xff]
        %v531 = vld [vmem:[%s529 + $0x8] sm:$0xff]
        %v532 = vld [vmem:[%s529 + $0x10] sm:$0xff]
        %v533 = vld [vmem:[%s529 + $0x18] sm:$0xff]
        %s534 = scalar_lea.vmem %s114, 672
        %v535 = vld [vmem:[%s534] sm:$0xff]
        %v536 = vld [vmem:[%s534 + $0x8] sm:$0xff]
        %v537 = vld [vmem:[%s534 + $0x10] sm:$0xff]
        %v538 = vld [vmem:[%s534 + $0x18] sm:$0xff]
        %s539 = scalar_lea.vmem %s114, 864
        %v540 = vld [vmem:[%s539] sm:$0xff]
        %v541 = vld [vmem:[%s539 + $0x8] sm:$0xff]
        %v542 = vld [vmem:[%s539 + $0x10] sm:$0xff]
        %v543 = vld [vmem:[%s539 + $0x18] sm:$0xff]
        %s544 = scalar_lea.vmem %s114, 1056
        %v545 = vld [vmem:[%s544] sm:$0xff]
        %v546 = vld [vmem:[%s544 + $0x8] sm:$0xff]
        %v547 = vld [vmem:[%s544 + $0x10] sm:$0xff]
        %v548 = vld [vmem:[%s544 + $0x18] sm:$0xff]
        %s549 = scalar_lea.vmem %s114, 1248
        %v550 = vld [vmem:[%s549] sm:$0xff]
        %v551 = vld [vmem:[%s549 + $0x8] sm:$0xff]
        %v552 = vld [vmem:[%s549 + $0x10] sm:$0xff]
        %v553 = vld [vmem:[%s549 + $0x18] sm:$0xff]
        %554 = vxpose.xlu0.b32.start [1/16] %v520, 128
        %555 = vxpose.xlu0.b32.cont [2/16] %v521, 128
        %556 = vxpose.xlu0.b32.cont [3/16] %v522, 128
        %557 = vxpose.xlu0.b32.cont [4/16] %v523, 128
        %558 = vxpose.xlu0.b32.cont [5/16] %v525, 128
        %559 = vxpose.xlu0.b32.cont [6/16] %v526, 128
        %560 = vxpose.xlu0.b32.cont [7/16] %v527, 128
        %561 = vxpose.xlu0.b32.cont [8/16] %v528, 128
        %562 = vxpose.xlu0.b32.cont [9/16] %v530, 128
        %563 = vxpose.xlu0.b32.cont [10/16] %v531, 128
        %564 = vxpose.xlu0.b32.cont [11/16] %v532, 128
        %565 = vxpose.xlu0.b32.cont [12/16] %v533, 128
        %566 = vxpose.xlu0.b32.cont [13/16] %v535, 128
        %567 = vxpose.xlu0.b32.cont [14/16] %v536, 128
        %568 = vxpose.xlu0.b32.cont [15/16] %v537, 128
        %569 = vxpose.xlu0.b32.end [16/16] %v538, 128
        %v570 = vpop.trf.xlu0
        %v571 = vpop.trf.xlu0
        %v572 = vpop.trf.xlu0
        %v573 = vpop.trf.xlu0
        %v574 = vpop.trf.xlu0
        %v575 = vpop.trf.xlu0
        %v576 = vpop.trf.xlu0
        %v577 = vpop.trf.xlu0
        %v578 = vpop.trf.xlu0
        %v579 = vpop.trf.xlu0
        %v580 = vpop.trf.xlu0
        %v581 = vpop.trf.xlu0
        %v582 = vpop.trf.xlu0
        %v583 = vpop.trf.xlu0
        %v584 = vpop.trf.xlu0
        %v585 = vpop.trf.xlu0
        %586 = vxpose.xlu0.b32.start [1/16] %v540, 128
        %587 = vxpose.xlu0.b32.cont [2/16] %v541, 128
        %588 = vxpose.xlu0.b32.cont [3/16] %v542, 128
        %589 = vxpose.xlu0.b32.cont [4/16] %v543, 128
        %590 = vxpose.xlu0.b32.cont [5/16] %v545, 128
        %591 = vxpose.xlu0.b32.cont [6/16] %v546, 128
        %592 = vxpose.xlu0.b32.cont [7/16] %v547, 128
        %593 = vxpose.xlu0.b32.cont [8/16] %v548, 128
        %594 = vxpose.xlu0.b32.cont [9/16] %v550, 128
        %595 = vxpose.xlu0.b32.cont [10/16] %v551, 128
        %596 = vxpose.xlu0.b32.cont [11/16] %v552, 128
        %597 = vxpose.xlu0.b32.cont [12/16] %v553, 128
        %598 = vxpose.xlu0.b32.cont [13/16] 0.0, 128
        %599 = vxpose.xlu0.b32.cont [14/16] 0.0, 128
        %600 = vxpose.xlu0.b32.cont [15/16] 0.0, 128
        %601 = vxpose.xlu0.b32.end [16/16] 0.0, 128
        %v602 = vpop.trf.xlu0
        %v603 = vpop.trf.xlu0
        %v604 = vpop.trf.xlu0
        %v605 = vpop.trf.xlu0
        %v606 = vpop.trf.xlu0
        %v607 = vpop.trf.xlu0
        %v608 = vpop.trf.xlu0
        %v609 = vpop.trf.xlu0
        %v610 = vpop.trf.xlu0
        %v611 = vpop.trf.xlu0
        %v612 = vpop.trf.xlu0
        %v613 = vpop.trf.xlu0
        %v614 = vpop.trf.xlu0
        %v615 = vpop.trf.xlu0
        %v616 = vpop.trf.xlu0
        %v617 = vpop.trf.xlu0
        %618 = vst [vmem:[%s109 + $0x40] sm:$0xff] %v570
        %619 = vst.msk [vmem:[%s109 + $0x48] sm:$0xff] %vm214, %v602
        %s620 = scalar_lea.vmem %s114, 160
        %v621 = vld [vmem:[%s620] sm:$0xff]
        %v622 = vld [vmem:[%s620 + $0x8] sm:$0xff]
        %v623 = vld [vmem:[%s620 + $0x10] sm:$0xff]
        %v624 = vld [vmem:[%s620 + $0x18] sm:$0xff]
        %s625 = scalar_lea.vmem %s114, 352
        %v626 = vld [vmem:[%s625] sm:$0xff]
        %v627 = vld [vmem:[%s625 + $0x8] sm:$0xff]
        %v628 = vld [vmem:[%s625 + $0x10] sm:$0xff]
        %v629 = vld [vmem:[%s625 + $0x18] sm:$0xff]
        %s630 = scalar_lea.vmem %s114, 544
        %v631 = vld [vmem:[%s630] sm:$0xff]
        %v632 = vld [vmem:[%s630 + $0x8] sm:$0xff]
        %v633 = vld [vmem:[%s630 + $0x10] sm:$0xff]
        %v634 = vld [vmem:[%s630 + $0x18] sm:$0xff]
        %s635 = scalar_lea.vmem %s114, 736
        %v636 = vld [vmem:[%s635] sm:$0xff]
        %v637 = vld [vmem:[%s635 + $0x8] sm:$0xff]
        %v638 = vld [vmem:[%s635 + $0x10] sm:$0xff]
        %v639 = vld [vmem:[%s635 + $0x18] sm:$0xff]
        %s640 = scalar_lea.vmem %s114, 928
        %v641 = vld [vmem:[%s640] sm:$0xff]
        %v642 = vld [vmem:[%s640 + $0x8] sm:$0xff]
        %v643 = vld [vmem:[%s640 + $0x10] sm:$0xff]
        %v644 = vld [vmem:[%s640 + $0x18] sm:$0xff]
        %s645 = scalar_lea.vmem %s114, 1120
        %v646 = vld [vmem:[%s645] sm:$0xff]
        %v647 = vld [vmem:[%s645 + $0x8] sm:$0xff]
        %v648 = vld [vmem:[%s645 + $0x10] sm:$0xff]
        %v649 = vld [vmem:[%s645 + $0x18] sm:$0xff]
        %s650 = scalar_lea.vmem %s114, 1312
        %v651 = vld [vmem:[%s650] sm:$0xff]
        %v652 = vld [vmem:[%s650 + $0x8] sm:$0xff]
        %v653 = vld [vmem:[%s650 + $0x10] sm:$0xff]
        %v654 = vld [vmem:[%s650 + $0x18] sm:$0xff]
        %655 = vxpose.xlu0.b32.start [1/16] %v621, 128
        %656 = vxpose.xlu0.b32.cont [2/16] %v622, 128
        %657 = vxpose.xlu0.b32.cont [3/16] %v623, 128
        %658 = vxpose.xlu0.b32.cont [4/16] %v624, 128
        %659 = vxpose.xlu0.b32.cont [5/16] %v626, 128
        %660 = vxpose.xlu0.b32.cont [6/16] %v627, 128
        %661 = vxpose.xlu0.b32.cont [7/16] %v628, 128
        %662 = vxpose.xlu0.b32.cont [8/16] %v629, 128
        %663 = vxpose.xlu0.b32.cont [9/16] %v631, 128
        %664 = vxpose.xlu0.b32.cont [10/16] %v632, 128
        %665 = vxpose.xlu0.b32.cont [11/16] %v633, 128
        %666 = vxpose.xlu0.b32.cont [12/16] %v634, 128
        %667 = vxpose.xlu0.b32.cont [13/16] %v636, 128
        %668 = vxpose.xlu0.b32.cont [14/16] %v637, 128
        %669 = vxpose.xlu0.b32.cont [15/16] %v638, 128
        %670 = vxpose.xlu0.b32.end [16/16] %v639, 128
        %v671 = vpop.trf.xlu0
        %v672 = vpop.trf.xlu0
        %v673 = vpop.trf.xlu0
        %v674 = vpop.trf.xlu0
        %v675 = vpop.trf.xlu0
        %v676 = vpop.trf.xlu0
        %v677 = vpop.trf.xlu0
        %v678 = vpop.trf.xlu0
        %v679 = vpop.trf.xlu0
        %v680 = vpop.trf.xlu0
        %v681 = vpop.trf.xlu0
        %v682 = vpop.trf.xlu0
        %v683 = vpop.trf.xlu0
        %v684 = vpop.trf.xlu0
        %v685 = vpop.trf.xlu0
        %v686 = vpop.trf.xlu0
        %687 = vxpose.xlu0.b32.start [1/16] %v641, 128
        %688 = vxpose.xlu0.b32.cont [2/16] %v642, 128
        %689 = vxpose.xlu0.b32.cont [3/16] %v643, 128
        %690 = vxpose.xlu0.b32.cont [4/16] %v644, 128
        %691 = vxpose.xlu0.b32.cont [5/16] %v646, 128
        %692 = vxpose.xlu0.b32.cont [6/16] %v647, 128
        %693 = vxpose.xlu0.b32.cont [7/16] %v648, 128
        %694 = vxpose.xlu0.b32.cont [8/16] %v649, 128
        %695 = vxpose.xlu0.b32.cont [9/16] %v651, 128
        %696 = vxpose.xlu0.b32.cont [10/16] %v652, 128
        %697 = vxpose.xlu0.b32.cont [11/16] %v653, 128
        %698 = vxpose.xlu0.b32.cont [12/16] %v654, 128
        %699 = vxpose.xlu0.b32.cont [13/16] 0.0, 128
        %700 = vxpose.xlu0.b32.cont [14/16] 0.0, 128
        %701 = vxpose.xlu0.b32.cont [15/16] 0.0, 128
        %702 = vxpose.xlu0.b32.end [16/16] 0.0, 128
        %v703 = vpop.trf.xlu0
        %v704 = vpop.trf.xlu0
        %v705 = vpop.trf.xlu0
        %v706 = vpop.trf.xlu0
        %v707 = vpop.trf.xlu0
        %v708 = vpop.trf.xlu0
        %v709 = vpop.trf.xlu0
        %v710 = vpop.trf.xlu0
        %v711 = vpop.trf.xlu0
        %v712 = vpop.trf.xlu0
        %v713 = vpop.trf.xlu0
        %v714 = vpop.trf.xlu0
        %v715 = vpop.trf.xlu0
        %v716 = vpop.trf.xlu0
        %v717 = vpop.trf.xlu0
        %v718 = vpop.trf.xlu0
        %719 = vst [vmem:[%s109 + $0x50] sm:$0xff] %v671
        %720 = vst.msk [vmem:[%s109 + $0x58] sm:$0xff] %vm214, %v703
        %s721 = sand.u32 %s49, 1
        %s722 = scalar_lea.sflag [#allocation3], %s721
        %s723 = sand.u32 %s49, 1
        %s724 = smul.addr %s723, 96
        %s725 = scalar_lea.vmem [#allocation2], %s724
        // Predicated region
        $region25: #{tpu_custom_call.1} parent=23 // pred_check
          %p726 = pneg %p59
        $region26: #{tpu_custom_call.1} parent=23 // pred_check_branch
          %728 = sbr.rel (%p726) target = $region28
        $region27: #{tpu_custom_call.1} parent=23 // pred_region
          %s730 = ssub.s32 1536, 1536
          %731 = vsyncadd %s722, %s730
          %s732 = smul.addr %s15, 12
          %s733 = smul.addr %s732, 128
          %s734 = scalar_lea.hbm %s1, %s733
          %s735 = sshll.u32 %s725, 4
          %s736 = int_to_ptr.vmem [resolvable:$true] %s735
          %741 = dma.vmem_to_hbm [thread:$0]  %s736, 1536, %s734, %s722, 256, 256, 16
        $region28: #{tpu_custom_call.1} parent=23 // pred_fallthru
          _
      $region24: #{tpu_custom_call.1} parent=5 // pred_fallthru
        _
      %p742 = scmp.le.s32.totalorder 2, %s10
      // Predicated region
      $region29: #{tpu_custom_call.1} parent=5 // pred_check
        %p743 = pneg %p742
      $region30: #{tpu_custom_call.1} parent=5 // pred_check_branch
        %745 = sbr.rel (%p743) target = $region32
      $region31: #{tpu_custom_call.1} parent=5 // pred_region
        %s746 = ssub.s32 %s10, 2
        // Predicated region
        $region33: #{tpu_custom_call.1} parent=31 // pred_check
          %p747 = pneg %p65
        $region34: #{tpu_custom_call.1} parent=31 // pred_check_branch
          %749 = sbr.rel (%p747) target = $region36
        $region35: #{tpu_custom_call.1} parent=31 // pred_region
          %s750 = sand.u32 %s50, 1
          %s751 = scalar_lea.sflag [#allocation3], %s750
          %s752 = sand.u32 %s50, 1
          %s753 = smul.addr %s752, 96
          %s754 = scalar_lea.vmem [#allocation2], %s753
          %755 = dma.done %s751, 1536
        $region36: #{tpu_custom_call.1} parent=31 // pred_fallthru
          _
      $region32: #{tpu_custom_call.1} parent=5 // pred_fallthru
        _
    $region6: #{tpu_custom_call.1} parent=1 // loop_footer
      %s14 = sadd.s32 1, %s10
    $region7: #{tpu_custom_call.1} parent=1 // loop_footer_branch
      %9 = sbr.rel target = $region3
    $region8: #{tpu_custom_call.1} parent=1 // loop_exit
      _
    %756 = vsyncpa [#allocation3], 1
    %s757 = scalar_lea.sflag [#allocation3], 1
    %758 = vsyncpa %s757, 1

</llo_original>
